<compile_context>
chip_gen: v7x
topology: tpu7x:2x2x1
jax: 0.10.0
libtpu: 0.0.40
codegen_flags: <defaults>
</compile_context>

<pallas_src>
import math

import jax
import jax.numpy as jnp
import numpy as np
from jax import lax
from jax.experimental import pallas as pl
from jax.experimental.pallas import tpu as pltpu


def _round_up(x, m):
    return ((x + m - 1) // m) * m


def _mosaic_params(dimension_semantics, block_bytes):
    # Raise the scoped-VMEM ceiling above v5e's 16 MiB default with headroom
    # for double-buffering, but stay well under v7x's 64 MiB physical VMEM.
    limit = int(min(max(32 * 1024 * 1024, 4 * block_bytes), 48 * 1024 * 1024))
    return pltpu.CompilerParams(dimension_semantics=dimension_semantics,
                                vmem_limit_bytes=limit)


# ----------------------------------------------------------------------------
# Pallas kernel 1: dense  out = x @ w + b, tiled over (M, N), full K per block.
# Used for the hoisted per-layer input projection and the packed output linear.
# ----------------------------------------------------------------------------
def _dense_kernel(x_ref, w_ref, b_ref, o_ref):
    o_ref[...] = (jnp.dot(x_ref[...], w_ref[...],
                          preferred_element_type=jnp.float32)
                  + b_ref[...])


def dense(x, w, b, *, tm=256, tn=256):
    """x: (M, K), w: (K, N), b: (1, N) -> (M, N) float32.

    Tiled grid over M and N ("parallel", "parallel"); K is kept whole per block
    (small here).  M is padded to a multiple of the sublane tile, N to the lane
    tile, and sliced back afterwards.
    """
    M, K = x.shape
    K2, N = w.shape
    assert K == K2 and b.shape == (1, N)

    tm = min(tm, _round_up(M, 8))      # multiple of 8 (sublanes)
    tn = min(tn, _round_up(N, 128))    # multiple of 128 (lanes)
    Mp = _round_up(M, tm)
    Np = _round_up(N, tn)
    if Mp != M:
        x = jnp.pad(x, ((0, Mp - M), (0, 0)))
    if Np != N:
        w = jnp.pad(w, ((0, 0), (0, Np - N)))
        b = jnp.pad(b, ((0, 0), (0, Np - N)))

    grid = (Mp // tm, Np // tn)
    block_bytes = 4 * (tm * K + K * tn + tn + tm * tn)

    out = pl.pallas_call(
        _dense_kernel,
        out_shape=jax.ShapeDtypeStruct((Mp, Np), jnp.float32),
        grid_spec=pltpu.PrefetchScalarGridSpec(
            num_scalar_prefetch=0,
            grid=grid,
            in_specs=[pl.BlockSpec((tm, K), lambda i, j: (i, 0)),
                      pl.BlockSpec((K, tn), lambda i, j: (0, j)),
                      pl.BlockSpec((1, tn), lambda i, j: (0, j))],
            out_specs=pl.BlockSpec((tm, tn), lambda i, j: (i, j))),
        compiler_params=_mosaic_params(("parallel", "parallel"), block_bytes),
        cost_estimate=pl.CostEstimate(
            flops=2 * Mp * K * Np,
            transcendentals=0,
            bytes_accessed=4 * (Mp * K + K * Np + Np + Mp * Np)),
    )(x, w, b)

    if (Mp, Np) != (M, N):
        out = out[:M, :N]
    return out


# ----------------------------------------------------------------------------
# Pallas kernel 2: single-layer LSTM recurrence, gx streamed through a T-grid.
# gates_x (input projection + fused bias) is precomputed, so the serial loop
# only does ONE fused h @ W_hh (B,Hp)x(Hp,4Hp) matmul per step.  h/c are VMEM
# scratch persisting across grid steps; gx blocks / h_seq blocks are pipelined.
# ----------------------------------------------------------------------------
def _sigmoid(x):
    # sigmoid(x) == 0.5 * (1 + tanh(0.5 x)): one EUP op instead of exp + recip.
    return 0.5 * (jnp.tanh(0.5 * x) + 1.0)


def _lstm_recurrence_kernel(gx_ref, whh_ref, h_seq_ref, h_scr, c_scr):
    t_block, B, G4 = gx_ref.shape
    Hp = G4 // 4

    @pl.when(pl.program_id(0) == 0)
    def _():
        h_scr[...] = jnp.zeros_like(h_scr)
        c_scr[...] = jnp.zeros_like(c_scr)

    def body(t, carry):
        h, c = carry
        # W_hh read from VMEM at the dot site (no 64-vreg hoist / spills).
        gates = gx_ref[t] + jnp.dot(h, whh_ref[...],
                                    preferred_element_type=jnp.float32)
        i_g = _sigmoid(gates[:, 0 * Hp:1 * Hp])
        f_g = _sigmoid(gates[:, 1 * Hp:2 * Hp])
        g_g = jnp.tanh(gates[:, 2 * Hp:3 * Hp])
        o_g = _sigmoid(gates[:, 3 * Hp:4 * Hp])
        c_new = f_g * c + i_g * g_g
        h_new = o_g * jnp.tanh(c_new)
        h_seq_ref[t] = h_new
        return (h_new, c_new)

    h, c = lax.fori_loop(0, t_block, body, (h_scr[...], c_scr[...]), unroll=2)
    h_scr[...] = h
    c_scr[...] = c


def lstm_layer_recurrence(gx, whh_T, t_block):
    """gx: (T_pad, B_pad, 4*Hp) precomputed input gates (i|f|g|o blocks of Hp),
    whh_T: (Hp, 4*Hp) fused recurrent weights.  Returns h_seq (T_pad, B_pad, Hp)."""
    Tp, Bp, G4 = gx.shape
    Hp = G4 // 4
    assert Tp % t_block == 0
    grid = (Tp // t_block,)

    block_bytes = 4 * (t_block * Bp * G4 + Hp * G4 + t_block * Bp * Hp
                       + 2 * Bp * Hp)

    return pl.pallas_call(
        _lstm_recurrence_kernel,
        out_shape=jax.ShapeDtypeStruct((Tp, Bp, Hp), jnp.float32),
        grid_spec=pltpu.PrefetchScalarGridSpec(
            num_scalar_prefetch=0,
            grid=grid,
            in_specs=[pl.BlockSpec((t_block, Bp, G4), lambda t: (t, 0, 0)),
                      pl.BlockSpec((Hp, G4), lambda t: (0, 0))],
            out_specs=pl.BlockSpec((t_block, Bp, Hp), lambda t: (t, 0, 0)),
            scratch_shapes=[pltpu.VMEM((Bp, Hp), jnp.float32),   # h carry
                            pltpu.VMEM((Bp, Hp), jnp.float32)]), # c carry
        compiler_params=_mosaic_params(("arbitrary",), block_bytes),
        cost_estimate=pl.CostEstimate(
            flops=2 * Tp * Bp * Hp * G4,
            transcendentals=5 * Tp * Bp * Hp,
            bytes_accessed=4 * (Tp * Bp * G4 + Hp * G4 + Tp * Bp * Hp)),
    )(gx, whh_T)


# ----------------------------------------------------------------------------
# DecoderRNN module (parameters + forward glue around the Pallas kernels).
# ----------------------------------------------------------------------------
class DecoderRNN:
    def __init__(self, embed_size, hidden_size, vocab_size, num_layers, key,
                 t_block=4):
        self.embed_size = embed_size
        self.hidden_size = hidden_size
        self.vocab_size = vocab_size
        self.num_layers = num_layers
        self.t_block = t_block

        H = hidden_size
        Hp = _round_up(H, 128)           # lane-dense hidden width
        self.hidden_pad = Hp
        self.vocab_pad = _round_up(vocab_size, 128)

        keys = jax.random.split(key, 2 + 4 * num_layers)
        k = iter(keys)

        # nn.Embedding, init_weights: uniform(-0.1, 0.1)
        self.embed_w = jax.random.uniform(
            next(k), (vocab_size, embed_size), jnp.float32, -0.1, 0.1)

        # nn.LSTM default init: uniform(-1/sqrt(H), 1/sqrt(H)); gate order i,f,g,o
        bound = 1.0 / math.sqrt(H)
        self.layers_raw = []   # PyTorch-layout weights (for the reference)
        self.layers = []       # padded / packed kernel layouts
        for l in range(num_layers):
            in_size = embed_size if l == 0 else H
            kern_in = embed_size if l == 0 else Hp
            w_ih = jax.random.uniform(next(k), (4 * H, in_size),
                                      jnp.float32, -bound, bound)
            w_hh = jax.random.uniform(next(k), (4 * H, H),
                                      jnp.float32, -bound, bound)
            b_ih = jax.random.uniform(next(k), (4 * H,),
                                      jnp.float32, -bound, bound)
            b_hh = jax.random.uniform(next(k), (4 * H,),
                                      jnp.float32, -bound, bound)
            self.layers_raw.append((w_ih, w_hh, b_ih, b_hh))

            # Padded gate layout: columns [g*Hp : g*Hp+H] hold gate g; padded
            # lanes are zero, so the extra hidden lanes provably stay 0.
            w_ih_T = jnp.zeros((kern_in, 4 * Hp), jnp.float32)
            whh_T = jnp.zeros((Hp, 4 * Hp), jnp.float32)
            bias = jnp.zeros((1, 4 * Hp), jnp.float32)
            for g in range(4):
                w_ih_T = w_ih_T.at[:in_size, g * Hp:g * Hp + H].set(
                    w_ih[g * H:(g + 1) * H, :].T)
                whh_T = whh_T.at[:H, g * Hp:g * Hp + H].set(
                    w_hh[g * H:(g + 1) * H, :].T)
                bias = bias.at[0, g * Hp:g * Hp + H].set(
                    b_ih[g * H:(g + 1) * H] + b_hh[g * H:(g + 1) * H])
            self.layers.append((w_ih_T, bias, whh_T))

        # nn.Linear, init_weights: weight uniform(-0.1, 0.1), bias 0.
        lin_w = jax.random.uniform(next(k), (vocab_size, H),
                                   jnp.float32, -0.1, 0.1)
        self.lin_w_raw = lin_w
        self.lin_w_T = jnp.zeros((Hp, self.vocab_pad),
                                 jnp.float32).at[:H, :vocab_size].set(lin_w.T)
        self.lin_b = jnp.zeros((1, self.vocab_pad), jnp.float32)

    def forward(self, features, captions, lengths):
        """features: (B, E) f32; captions: (B, Tc) int32; lengths: python list
        of ints, sorted descending, max == Tc + 1.  Returns (packed_outputs
        (total, V), batch_sizes (T,)), matching torch pack_padded_sequence /
        LSTM / Linear semantics (noise=False)."""
        B, Tc = captions.shape
        V = self.vocab_size
        Hp = self.hidden_pad
        T = Tc + 1
        assert max(lengths) == T and list(lengths) == sorted(lengths, reverse=True)

        # embeddings = embed(captions); concat features at t=0
        embeddings = jnp.take(self.embed_w, captions, axis=0)          # (B, Tc, E)
        embeddings = jnp.concatenate(
            [features[:, None, :].astype(jnp.float32), embeddings], axis=1)

        # Time-major, batch padded to 8 sublanes, T padded to the stream block.
        B_pad = _round_up(B, 8)
        T_pad = _round_up(T, self.t_block)
        x = jnp.transpose(embeddings, (1, 0, 2)).astype(jnp.float32)   # (T, B, E)
        x = jnp.pad(x, ((0, T_pad - T), (0, B_pad - B), (0, 0)))       # (Tp, Bp, E)

        # Per layer: hoisted full-sequence input projection (one tiled matmul),
        # then the streamed serial recurrence.  No gate transpose in between.
        for (w_ih_T, bias, whh_T) in self.layers:
            in_size = x.shape[-1]
            gx = dense(x.reshape(T_pad * B_pad, in_size), w_ih_T, bias)  # (Tp*Bp, 4Hp)
            gx = gx.reshape(T_pad, B_pad, 4 * Hp)                        # pure reshape
            x = lstm_layer_recurrence(gx, whh_T, self.t_block)           # (Tp, Bp, Hp)

        # pack_padded_sequence ordering; gather the valid rows BEFORE the vocab
        # projection so the output linear only runs on sum(lengths) rows.
        # NOTE: `lengths` is baked into the trace (recompiles per pattern).
        t_idx, b_idx, batch_sizes = [], [], []
        for t in range(T):
            bs = 0
            for b in range(B):
                if lengths[b] > t:
                    t_idx.append(t)
                    b_idx.append(b)
                    bs += 1
            batch_sizes.append(bs)
        flat_idx = jnp.array([t * B_pad + b for t, b in zip(t_idx, b_idx)],
                             jnp.int32)
        h_packed = jnp.take(x.reshape(T_pad * B_pad, Hp), flat_idx, axis=0)

        logits = dense(h_packed, self.lin_w_T, self.lin_b)               # (total, Vp)
        return logits[:, :V], jnp.array(batch_sizes, jnp.int32)


# ----------------------------------------------------------------------------
# Pure-JAX reference (lax.scan LSTM, raw PyTorch-layout weights) for a
# correctness sanity check.
# ----------------------------------------------------------------------------
def reference_forward(model, features, captions, lengths):
    H = model.hidden_size
    embeddings = jnp.take(model.embed_w, captions, axis=0)
    embeddings = jnp.concatenate(
        [features[:, None, :].astype(jnp.float32), embeddings], axis=1)
    x = jnp.transpose(embeddings, (1, 0, 2)).astype(jnp.float32)        # (T, B, E)
    B = x.shape[1]
    for (w_ih, w_hh, b_ih, b_hh) in model.layers_raw:
        def step(carry, xt, w_ih=w_ih, w_hh=w_hh, b=b_ih + b_hh):
            h, c = carry
            g = xt @ w_ih.T + h @ w_hh.T + b
            i = jax.nn.sigmoid(g[:, 0 * H:1 * H])
            f = jax.nn.sigmoid(g[:, 1 * H:2 * H])
            gg = jnp.tanh(g[:, 2 * H:3 * H])
            o = jax.nn.sigmoid(g[:, 3 * H:4 * H])
            c = f * c + i * gg
            h = o * jnp.tanh(c)
            return (h, c), h

        init = (jnp.zeros((B, H), jnp.float32), jnp.zeros((B, H), jnp.float32))
        _, x = lax.scan(step, init, x)
    logits = x @ model.lin_w_raw.T                                        # bias 0
    t_idx, b_idx = [], []
    for t in range(x.shape[0]):
        for b in range(B):
            if lengths[b] > t:
                t_idx.append(t)
                b_idx.append(b)
    return logits[jnp.array(t_idx), jnp.array(b_idx)]


if __name__ == "__main__":
    embed_size, hidden_size, vocab_size, num_layers = 32, 32, 40, 2
    B, Tc = 2, 7
    lengths = [8, 6]  # sorted descending, max == Tc + 1

    key = jax.random.PRNGKey(0)
    k_model, k_feat, k_cap = jax.random.split(key, 3)

    model = DecoderRNN(embed_size, hidden_size, vocab_size, num_layers, k_model)
    features = jax.random.normal(k_feat, (B, embed_size), jnp.float32)
    captions = jax.random.randint(k_cap, (B, Tc), 0, vocab_size, jnp.int32)

    outputs, batch_sizes = model.forward(features, captions, lengths)
    outputs = jax.block_until_ready(outputs)
    batch_sizes = jax.block_until_ready(batch_sizes)

    assert outputs.shape == (sum(lengths), vocab_size)
    assert batch_sizes.shape == (max(lengths),)

    ref = jax.block_until_ready(
        reference_forward(model, features, captions, lengths))
    np.testing.assert_allclose(np.asarray(outputs), np.asarray(ref),
                               rtol=1e-4, atol=1e-4)

    print("KERNEL_OK")
</pallas_src>

<mosaic_0001>
module attributes {stable_mosaic.version = 11 : i64} {
  func.func @_dense_kernel(%arg0: i32, %arg1: i32, %arg2: memref<64x32xf32, #tpu.memory_space<vmem>>, %arg3: memref<32x256xf32, #tpu.memory_space<vmem>>, %arg4: memref<1x256xf32, #tpu.memory_space<vmem>>, %arg5: memref<64x256xf32, #tpu.memory_space<vmem>>) attributes {dimension_semantics = [#tpu.dimension_semantics<parallel>, #tpu.dimension_semantics<parallel>], iteration_bounds = array<i64: 1, 2>, scalar_prefetch = 0 : i64, scratch_operands = 0 : i64, tpu.core_type = #tpu.core_type<tc>, window_params = [{transform_indices = @transform_0, window_bounds = array<i64: 64, 32>}, {transform_indices = @transform_1, window_bounds = array<i64: 32, 256>}, {transform_indices = @transform_2, window_bounds = array<i64: 1, 256>}, {transform_indices = @transform_3, window_bounds = array<i64: 64, 256>}]} {
    %c0 = arith.constant 0 : index
    %c0_0 = arith.constant 0 : index
    %0 = vector.load %arg2[%c0, %c0_0] : memref<64x32xf32, #tpu.memory_space<vmem>>, vector<64x32xf32>
    %c0_1 = arith.constant 0 : index
    %c0_2 = arith.constant 0 : index
    %1 = vector.load %arg3[%c0_1, %c0_2] : memref<32x256xf32, #tpu.memory_space<vmem>>, vector<32x256xf32>
    %cst = arith.constant dense<0.000000e+00> : vector<64x256xf32>
    %2 = tpu.matmul %0, %1, %cst {dimension_numbers = #tpu.dot_dimension_numbers<[1], [0], [0], [1], [0, 0, 1, 1], [], []>} : vector<64x32xf32>, vector<32x256xf32>, vector<64x256xf32> -> vector<64x256xf32>
    %c0_3 = arith.constant 0 : index
    %c0_4 = arith.constant 0 : index
    %3 = vector.load %arg4[%c0_3, %c0_4] : memref<1x256xf32, #tpu.memory_space<vmem>>, vector<1x256xf32>
    %4 = vector.broadcast %3 : vector<1x256xf32> to vector<64x256xf32>
    %5 = arith.addf %2, %4 : vector<64x256xf32>
    %c0_5 = arith.constant 0 : index
    %c0_6 = arith.constant 0 : index
    %6 = vector.load %arg5[%c0_5, %c0_6] : memref<64x256xf32, #tpu.memory_space<vmem>>, vector<64x256xf32>
    tpu.vector_store %arg5[%c0_5, %c0_6], %5 {strides = array<i32>} : memref<64x256xf32, #tpu.memory_space<vmem>>, vector<64x256xf32>,
    return
  }
  func.func @transform_0(%arg0: i32, %arg1: i32) -> (i32, i32) {
    %c0_i32 = arith.constant 0 : i32
    %c0_i32_0 = arith.constant 0 : i32
    return %arg0, %c0_i32 : i32, i32
  }
  func.func @transform_1(%arg0: i32, %arg1: i32) -> (i32, i32) {
    %c0_i32 = arith.constant 0 : i32
    %c0_i32_0 = arith.constant 0 : i32
    return %c0_i32, %arg1 : i32, i32
  }
  func.func @transform_2(%arg0: i32, %arg1: i32) -> (i32, i32) {
    %c0_i32 = arith.constant 0 : i32
    %c0_i32_0 = arith.constant 0 : i32
    return %c0_i32, %arg1 : i32, i32
  }
  func.func @transform_3(%arg0: i32, %arg1: i32) -> (i32, i32) {
    %c0_i32 = arith.constant 0 : i32
    return %arg0, %arg1 : i32, i32
  }
}

</mosaic_0001>

<llo_original>
// kernel: tpu_custom_call.1
$region0: #{tpu_custom_call.1}
  #allocation0 [shape = 'u32[]', space=smem, size = 0x4, offset = 0x4, fixed_abs, tag = 'smem constant byte address 0x4 - core index']
  #allocation1 [shape = 'u32[144,128]{1,0:T(1,128)}', space=vmem, size = 0x12000, scoped, tag = 'internal scratch']
  %s0 = inlined_call_operand.vmem [shape: f32[64,32], index: 0, kind: input, shape index: {}]
  %s1 = inlined_call_operand.hbm [shape: f32[32,512], index: 1, kind: input, shape index: {}]
  %s2 = inlined_call_operand.vmem [shape: f32[1,512], index: 2, kind: input, shape index: {}]
  %s3 = inlined_call_operand.hbm [shape: f32[64,512], index: 3, kind: output, shape index: {}]
  %s4 = sld [smem:[#allocation0]]
  $region49: #{tpu_custom_call.1} parent=0
    _
  %s6 = ssub.s32 1, %s4
  %s7 = scalar_select 0, %s6, %s4
  $region1: #{tpu_custom_call.1} parent=0
    #allocation2 [shape = 'u8[65536]{0}', space=vmem, size = 0x10000, scoped, tag = 'input window, operand 1']
    #allocation3 [shape = 's32[2]{0}', space=sflag, size = 0x8, scoped, tag = 'scoped memory for tpu_custom_call.1']
    #allocation4 [shape = 's32[2]{0}', space=sflag, size = 0x8, scoped, tag = 'scoped memory for tpu_custom_call.1']
    #allocation5 [shape = 'u8[131072]{0}', space=vmem, size = 0x20000, scoped, tag = 'output window, operand 0']
    %8 = vsyncpa [#allocation3], 0
    %s9 = scalar_lea.sflag [#allocation3], 1
    %10 = vsyncpa %s9, 0
    %11 = vsyncpa [#allocation4], 0
    %s12 = scalar_lea.sflag [#allocation4], 1
    %13 = vsyncpa %s12, 0
    loop: start=0, step=1, limit=4
    $region2: #{tpu_custom_call.1} parent=1 // loop_pre_header
      _
    $region3: #{tpu_custom_call.1} parent=1 // loop_header
      %s15 = sphi 0, %s19
      %p16 = scmp.ge.s32.totalorder %s15, 4
      %s22 = sphi 0, %s34
      %s23 = sphi 0, %s30
      %s24 = sphi 0, %s22
      %s25 = sphi 0, %s23
      %s26 = sphi 0, %s24
      %s27 = sphi 0, %s25
      %s37 = sphi 0, %s39
      %s40 = sphi 0, %s37
      %s41 = sphi 0, %s40
      %s57 = sphi 0, %s41
      %s63 = sphi 0, %s65
      %s66 = sphi 0, %s63
      %s67 = sphi 0, %s66
      %s83 = sphi 0, %s67
      %s89 = sphi 0, %s91
      %s92 = sphi 0, %s89
      %s93 = sphi 0, %s92
      %s109 = sphi 0, %s93
      %s117 = sphi 0, %s119
      %s120 = sphi 0, %s117
      %s121 = sphi 0, %s120
      %s137 = sphi 0, %s121
    $region4: #{tpu_custom_call.1} parent=1 // loop_header_branch
      %18 = sbr.rel (%p16) target = $region8
    $region5: #{tpu_custom_call.1} parent=1 // loop_body
      %s20 = ssub.s32 %s15, 1
      %s21 = ssub.s32 %s15, 2
      %s28 = sadd.s32 1, %s23
      %p29 = scmp.ge.s32.totalorder %s28, 2
      %s30 = scalar_select %p29, 0, %s28
      %s31 = sadd.s32 1, %s22
      %s32 = scalar_select %p29, %s31, %s22
      %p33 = scmp.ge.s32.totalorder %s32, 1
      %s34 = scalar_select %p33, 0, %s32
      %s35 = ssub.s32 %s22, %s34
      %p36 = scmp.eq.s32.totalorder %s35, 0
      %s38 = sadd.s32 %s37, 1
      %s39 = scalar_select %p36, %s37, %s38
      %p42 = pneg %p36
      %p43 = scmp.eq.s32.totalorder %s15, 1
      %p44 = por %p42, %p43
      %p45 = scmp.ne.s32.totalorder %s37, %s40
      %p46 = scmp.eq.s32.totalorder %s15, 0
      %p47 = por %p45, %p46
      %p48 = scmp.ne.s32.totalorder %s37, %s40
      %p49 = scmp.eq.s32.totalorder %s20, 1
      %p50 = por %p48, %p49
      %p51 = scmp.ne.s32.totalorder %s40, %s41
      %p52 = scmp.eq.s32.totalorder %s20, 0
      %p53 = por %p51, %p52
      %p54 = scmp.ne.s32.totalorder %s40, %s41
      %p55 = scmp.eq.s32.totalorder %s21, 1
      %p56 = por %p54, %p55
      %p58 = scmp.ne.s32.totalorder %s41, %s57
      %p59 = scmp.eq.s32.totalorder %s21, 0
      %p60 = por %p58, %p59
      %s61 = ssub.s32 %s23, %s30
      %p62 = scmp.eq.s32.totalorder %s61, 0
      %s64 = sadd.s32 %s63, 1
      %s65 = scalar_select %p62, %s63, %s64
      %p68 = pneg %p62
      %p69 = scmp.eq.s32.totalorder %s15, 1
      %p70 = por %p68, %p69
      %p71 = scmp.ne.s32.totalorder %s63, %s66
      %p72 = scmp.eq.s32.totalorder %s15, 0
      %p73 = por %p71, %p72
      %p74 = scmp.ne.s32.totalorder %s63, %s66
      %p75 = scmp.eq.s32.totalorder %s20, 1
      %p76 = por %p74, %p75
      %p77 = scmp.ne.s32.totalorder %s66, %s67
      %p78 = scmp.eq.s32.totalorder %s20, 0
      %p79 = por %p77, %p78
      %p80 = scmp.ne.s32.totalorder %s66, %s67
      %p81 = scmp.eq.s32.totalorder %s21, 1
      %p82 = por %p80, %p81
      %p84 = scmp.ne.s32.totalorder %s67, %s83
      %p85 = scmp.eq.s32.totalorder %s21, 0
      %p86 = por %p84, %p85
      %s87 = ssub.s32 %s23, %s30
      %p88 = scmp.eq.s32.totalorder %s87, 0
      %s90 = sadd.s32 %s89, 1
      %s91 = scalar_select %p88, %s89, %s90
      %p94 = pneg %p88
      %p95 = scmp.eq.s32.totalorder %s15, 1
      %p96 = por %p94, %p95
      %p97 = scmp.ne.s32.totalorder %s89, %s92
      %p98 = scmp.eq.s32.totalorder %s15, 0
      %p99 = por %p97, %p98
      %p100 = scmp.ne.s32.totalorder %s89, %s92
      %p101 = scmp.eq.s32.totalorder %s20, 1
      %p102 = por %p100, %p101
      %p103 = scmp.ne.s32.totalorder %s92, %s93
      %p104 = scmp.eq.s32.totalorder %s20, 0
      %p105 = por %p103, %p104
      %p106 = scmp.ne.s32.totalorder %s92, %s93
      %p107 = scmp.eq.s32.totalorder %s21, 1
      %p108 = por %p106, %p107
      %p110 = scmp.ne.s32.totalorder %s93, %s109
      %p111 = scmp.eq.s32.totalorder %s21, 0
      %p112 = por %p110, %p111
      %s113 = ssub.s32 %s22, %s34
      %s114 = ssub.s32 %s23, %s30
      %s115 = sor.u32 %s113, %s114
      %p116 = scmp.eq.s32.totalorder %s115, 0
      %s118 = sadd.s32 %s117, 1
      %s119 = scalar_select %p116, %s117, %s118
      %p122 = pneg %p116
      %p123 = scmp.eq.s32.totalorder %s15, 1
      %p124 = por %p122, %p123
      %p125 = scmp.ne.s32.totalorder %s117, %s120
      %p126 = scmp.eq.s32.totalorder %s15, 0
      %p127 = por %p125, %p126
      %p128 = scmp.ne.s32.totalorder %s117, %s120
      %p129 = scmp.eq.s32.totalorder %s20, 1
      %p130 = por %p128, %p129
      %p131 = scmp.ne.s32.totalorder %s120, %s121
      %p132 = scmp.eq.s32.totalorder %s20, 0
      %p133 = por %p131, %p132
      %p134 = scmp.ne.s32.totalorder %s120, %s121
      %p135 = scmp.eq.s32.totalorder %s21, 1
      %p136 = por %p134, %p135
      %p138 = scmp.ne.s32.totalorder %s121, %s137
      %p139 = scmp.eq.s32.totalorder %s21, 0
      %p140 = por %p138, %p139
      %p141 = scmp.le.s32.totalorder 1, %s15
      %p142 = scmp.lt.s32.totalorder %s15, 3
      %p143 = pnand %p141, %p142
      %p144 = pneg %p143
      // Predicated region
      $region9: #{tpu_custom_call.1} parent=5 // pred_check
        _
      $region10: #{tpu_custom_call.1} parent=5 // pred_check_branch
        %146 = sbr.rel (%p143) target = $region12
      $region11: #{tpu_custom_call.1} parent=5 // pred_region
        %s147 = ssub.s32 %s15, 1
        // Predicated region
        $region13: #{tpu_custom_call.1} parent=11 // pred_check
          %p148 = pneg %p53
        $region14: #{tpu_custom_call.1} parent=11 // pred_check_branch
          %150 = sbr.rel (%p148) target = $region16
        $region15: #{tpu_custom_call.1} parent=11 // pred_region
          %s151 = smul.u32 8, %s24
          %p152 = scmp.lt.s32.totalorder %s151, 7
          %s153 = scalar_select %p152, %s151, 7
          %s154 = smul.addr %s153, 8
          %s155 = scalar_lea.vmem %s0, %s154
          %s156 = smul.u32 8, %s24
        $region16: #{tpu_custom_call.1} parent=11 // pred_fallthru
          _
      $region12: #{tpu_custom_call.1} parent=5 // pred_fallthru
        _
      %p157 = scmp.lt.s32.totalorder %s15, 2
      // Predicated region
      $region17: #{tpu_custom_call.1} parent=5 // pred_check
        %p158 = pneg %p157
      $region18: #{tpu_custom_call.1} parent=5 // pred_check_branch
        %160 = sbr.rel (%p158) target = $region20
      $region19: #{tpu_custom_call.1} parent=5 // pred_region
        // Predicated region
        $region21: #{tpu_custom_call.1} parent=19 // pred_check
          %p161 = pneg %p73
        $region22: #{tpu_custom_call.1} parent=19 // pred_check_branch
          %163 = sbr.rel (%p161) target = $region24
        $region23: #{tpu_custom_call.1} parent=19 // pred_region
          %s164 = sand.u32 %s63, 1
          %s165 = scalar_lea.sflag [#allocation3], %s164
          %s166 = sand.u32 %s63, 1
          %s167 = smul.addr %s166, 64
          %s168 = scalar_lea.vmem [#allocation2], %s167
          %s169 = smul.u32 2, %s23
          %s171 = ssub.s32 1024, 1024
          %172 = vsyncadd %s165, %s171
          %s173 = smul.addr %s169, 128
          %s174 = scalar_lea.hbm %s1, %s173
          %s175 = sshll.u32 %s168, 4
          %s176 = int_to_ptr.vmem [resolvable:$true] %s175
          %181 = dma.hbm_to_vmem [thread:$0]  %s174, 1024, %s176, %s165, 512, 256, 16
        $region24: #{tpu_custom_call.1} parent=19 // pred_fallthru
          _
        // Predicated region
        $region25: #{tpu_custom_call.1} parent=19 // pred_check
          %p182 = pneg %p99
        $region26: #{tpu_custom_call.1} parent=19 // pred_check_branch
          %184 = sbr.rel (%p182) target = $region28
        $region27: #{tpu_custom_call.1} parent=19 // pred_region
          %s185 = smul.u32 2, %s23
          %p186 = scmp.lt.s32.totalorder %s185, 3
          %s187 = scalar_select %p186, %s185, 3
          %s188 = scalar_lea.vmem %s2, %s187
          %s189 = smul.u32 2, %s23
        $region28: #{tpu_custom_call.1} parent=19 // pred_fallthru
          _
      $region20: #{tpu_custom_call.1} parent=5 // pred_fallthru
        _
      %p190 = scmp.le.s32.totalorder 1, %s15
      %p191 = scmp.lt.s32.totalorder %s15, 3
      %p192 = pnand %p190, %p191
      %p193 = pneg %p192
      // Predicated region
      $region29: #{tpu_custom_call.1} parent=5 // pred_check
        _
      $region30: #{tpu_custom_call.1} parent=5 // pred_check_branch
        %195 = sbr.rel (%p192) target = $region32
      $region31: #{tpu_custom_call.1} parent=5 // pred_region
        %s196 = ssub.s32 %s15, 1
        %s197 = sand.u32 %s66, 1
        %s198 = scalar_lea.sflag [#allocation3], %s197
        %s199 = sand.u32 %s66, 1
        %s200 = smul.addr %s199, 64
        %s201 = scalar_lea.vmem [#allocation2], %s200
        // Predicated region
        $region33: #{tpu_custom_call.1} parent=31 // pred_check
          %p202 = pneg %p79
        $region34: #{tpu_custom_call.1} parent=31 // pred_check_branch
          %204 = sbr.rel (%p202) target = $region36
        $region35: #{tpu_custom_call.1} parent=31 // pred_region
          %205 = dma.done %s198, 1024
        $region36: #{tpu_custom_call.1} parent=31 // pred_fallthru
          _
        %s206 = smul.u32 8, %s24
        %p207 = scmp.lt.s32.totalorder %s206, 7
        %s208 = scalar_select %p207, %s206, 7
        %s209 = smul.addr %s208, 8
        %s210 = scalar_lea.vmem %s0, %s209
        %p211 = pneg %p53
        %p212 = pneg %p50
        %s213 = sand.u32 %s66, 1
        %s214 = scalar_lea.sflag [#allocation3], %s213
        %s215 = sand.u32 %s66, 1
        %s216 = smul.addr %s215, 64
        %s217 = scalar_lea.vmem [#allocation2], %s216
        %p218 = pneg %p79
        %p219 = pneg %p76
        %s220 = smul.u32 2, %s25
        %p221 = scmp.lt.s32.totalorder %s220, 3
        %s222 = scalar_select %p221, %s220, 3
        %s223 = scalar_lea.vmem %s2, %s222
        %p224 = pneg %p105
        %p225 = pneg %p102
        %p226 = pneg %p133
        %p227 = pneg %p130
        %s228 = sand.u32 %s120, 1
        %s229 = scalar_lea.sflag [#allocation4], %s228
        %s230 = sand.u32 %s120, 1
        %s231 = smul.addr %s230, 128
        %s232 = scalar_lea.vmem [#allocation5], %s231
        %s233 = smul.u32 8, %s24
        %p234 = scmp.lt.s32.totalorder %s233, 7
        %s235 = scalar_select %p234, %s233, 7
        %s236 = smul.addr %s235, 8
        %s237 = scalar_lea.vmem %s0, %s236
        %s238 = smul.u32 8, %s24
        %s239 = smul.u32 2, %s25
        %s240 = smul.u32 2, %s25
        %p241 = scmp.lt.s32.totalorder %s240, 3
        %s242 = scalar_select %p241, %s240, 3
        %s243 = scalar_lea.vmem %s2, %s242
        %s244 = smul.u32 2, %s25
        %s245 = smul.u32 8, %s24
        %s246 = smul.u32 2, %s25
        %v247 = vld [vmem:[%s237] sm:$0xff]
        %v248 = vld [vmem:[%s237 + $0x8] sm:$0xff]
        %v249 = vld [vmem:[%s237 + $0x10] sm:$0xff]
        %v250 = vld [vmem:[%s237 + $0x18] sm:$0xff]
        %v251 = vld [vmem:[%s237 + $0x20] sm:$0xff]
        %v252 = vld [vmem:[%s237 + $0x28] sm:$0xff]
        %v253 = vld [vmem:[%s237 + $0x30] sm:$0xff]
        %v254 = vld [vmem:[%s237 + $0x38] sm:$0xff]
        %v255 = vld [vmem:[%s201] sm:$0xff]
        %v256 = vld [vmem:[%s201 + $0x8] sm:$0xff]
        %v257 = vld [vmem:[%s201 + $0x10] sm:$0xff]
        %v258 = vld [vmem:[%s201 + $0x18] sm:$0xff]
        %v259 = vld [vmem:[%s201 + $0x20] sm:$0xff]
        %v260 = vld [vmem:[%s201 + $0x28] sm:$0xff]
        %v261 = vld [vmem:[%s201 + $0x30] sm:$0xff]
        %v262 = vld [vmem:[%s201 + $0x38] sm:$0xff]
        %v263 = vld [vmem:[%s243] sm:$0x3]
        %v265 = vlaneseq
        %v266 = vshrl.u32 %v265, 7
        %v267 = vsub.s32 0, %v266
        %v268 = vrot.slane %v263, %v267
        %v269 = vlaneseq
        %v270 = vshrl.u32 %v269, 7
        %v271 = vsub.s32 1, %v270
        %v272 = vrot.slane %v263, %v271
        %vm275 = vcmask 261120
        %v277 = vsel %vm275, %v247, 0
        %v280 = vsel %vm275, %v248, 0
        %v283 = vsel %vm275, %v249, 0
        %v286 = vsel %vm275, %v250, 0
        %v289 = vsel %vm275, %v251, 0
        %v292 = vsel %vm275, %v252, 0
        %v295 = vsel %vm275, %v253, 0
        %v298 = vsel %vm275, %v254, 0
        %300 = vmatprep.subr.mxu0 %v256
        %301 = vmatpush1.msra.mxu0 %v255
        %302 = vmatprep.subr.mxu0 %v258
        %303 = vmatpush1.msra.mxu0 %v257
        %304 = vmatprep.subr.mxu0 %v260
        %305 = vmatpush1.msra.mxu0 %v259
        %306 = vmatprep.subr.mxu0 %v262
        %307 = vmatpush1.msra.mxu0 %v261
        %308 = vmatprep.subr.mxu0 0.0
        %309 = vmatpush1.msra.mxu0 0.0
        %310 = vmatprep.subr.mxu0 0.0
        %311 = vmatpush1.msra.mxu0 0.0
        %312 = vmatprep.subr.mxu0 0.0
        %313 = vmatpush1.msra.mxu0 0.0
        %314 = vmatprep.subr.mxu0 0.0
        %315 = vmatpush1.msra.mxu0 0.0
        %316 = vmatprep.subr.mxu0 0.0
        %317 = vmatpush1.msra.mxu0 0.0
        %318 = vmatprep.subr.mxu0 0.0
        %319 = vmatpush1.msra.mxu0 0.0
        %320 = vmatprep.subr.mxu0 0.0
        %321 = vmatpush1.msra.mxu0 0.0
        %322 = vmatprep.subr.mxu0 0.0
        %323 = vmatpush1.msra.mxu0 0.0
        %324 = vmatprep.subr.mxu0 0.0
        %325 = vmatpush1.msra.mxu0 0.0
        %326 = vmatprep.subr.mxu0 0.0
        %327 = vmatpush1.msra.mxu0 0.0
        %328 = vmatprep.subr.mxu0 0.0
        %329 = vmatpush1.msra.mxu0 0.0
        %330 = vmatprep.subr.mxu0 0.0
        %331 = vmatpush1.msra.mxu0 0.0
        %332 = vmatprep.subr.mxu0 0.0
        %333 = vmatpush1.msra.mxu0 0.0
        %334 = vmatprep.subr.mxu0 0.0
        %335 = vmatpush1.msra.mxu0 0.0
        %336 = vmatprep.subr.mxu0 0.0
        %337 = vmatpush1.msra.mxu0 0.0
        %338 = vmatprep.subr.mxu0 0.0
        %339 = vmatpush1.msra.mxu0 0.0
        %340 = vmatprep.subr.mxu0 0.0
        %341 = vmatpush1.msra.mxu0 0.0
        %342 = vmatprep.subr.mxu0 0.0
        %343 = vmatpush1.msra.mxu0 0.0
        %344 = vmatprep.subr.mxu0 0.0
        %345 = vmatpush1.msra.mxu0 0.0
        %346 = vmatprep.subr.mxu0 0.0
        %347 = vmatpush1.msra.mxu0 0.0
        %348 = vmatprep.subr.mxu0 0.0
        %349 = vmatpush1.msra.mxu0 0.0
        %350 = vmatprep.subr.mxu0 0.0
        %351 = vmatpush1.msra.mxu0 0.0
        %352 = vmatprep.subr.mxu0 0.0
        %353 = vmatpush1.msra.mxu0 0.0
        %354 = vmatprep.subr.mxu0 0.0
        %355 = vmatpush1.msra.mxu0 0.0
        %356 = vmatprep.subr.mxu0 0.0
        %357 = vmatpush1.msra.mxu0 0.0
        %358 = vmatprep.subr.mxu0 0.0
        %359 = vmatpush1.msra.mxu0 0.0
        %360 = vmatprep.subr.mxu0 0.0
        %361 = vmatpush1.msra.mxu0 0.0
        %362 = vmatprep.subr.mxu0 0.0
        %363 = vmatpush1.msra.mxu0 0.0
        %364 = vmatprep.mubr.f32.mxu0 0.0
        %365 = vmatmul.mubr.f32.gmra.mrb[0].mxu0 %v277
        %v366 = vpop.f32.mrb[0].mxu0
        %v367 = vadd.f32 %v268, %v366
        %v368 = vpop.f32.mrb[0].mxu0
        %v369 = vadd.f32 %v272, %v368
        %370 = vmatprep.mubr.f32.mxu0 0.0
        %371 = vmatmul.mubr.f32.gmra.mrb[0].mxu0 %v280
        %v372 = vpop.f32.mrb[0].mxu0
        %v373 = vadd.f32 %v268, %v372
        %v374 = vpop.f32.mrb[0].mxu0
        %v375 = vadd.f32 %v272, %v374
        %376 = vmatprep.mubr.f32.mxu0 0.0
        %377 = vmatmul.mubr.f32.gmra.mrb[0].mxu0 %v283
        %v378 = vpop.f32.mrb[0].mxu0
        %v379 = vadd.f32 %v268, %v378
        %v380 = vpop.f32.mrb[0].mxu0
        %v381 = vadd.f32 %v272, %v380
        %382 = vmatprep.mubr.f32.mxu0 0.0
        %383 = vmatmul.mubr.f32.gmra.mrb[0].mxu0 %v286
        %v384 = vpop.f32.mrb[0].mxu0
        %v385 = vadd.f32 %v268, %v384
        %v386 = vpop.f32.mrb[0].mxu0
        %v387 = vadd.f32 %v272, %v386
        %388 = vmatprep.mubr.f32.mxu0 0.0
        %389 = vmatmul.mubr.f32.gmra.mrb[0].mxu0 %v289
        %v390 = vpop.f32.mrb[0].mxu0
        %v391 = vadd.f32 %v268, %v390
        %v392 = vpop.f32.mrb[0].mxu0
        %v393 = vadd.f32 %v272, %v392
        %394 = vmatprep.mubr.f32.mxu0 0.0
        %395 = vmatmul.mubr.f32.gmra.mrb[0].mxu0 %v292
        %v396 = vpop.f32.mrb[0].mxu0
        %v397 = vadd.f32 %v268, %v396
        %v398 = vpop.f32.mrb[0].mxu0
        %v399 = vadd.f32 %v272, %v398
        %400 = vmatprep.mubr.f32.mxu0 0.0
        %401 = vmatmul.mubr.f32.gmra.mrb[0].mxu0 %v295
        %v402 = vpop.f32.mrb[0].mxu0
        %v403 = vadd.f32 %v268, %v402
        %v404 = vpop.f32.mrb[0].mxu0
        %v405 = vadd.f32 %v272, %v404
        %406 = vmatprep.mubr.f32.mxu0 0.0
        %407 = vmatmul.mubr.f32.gmra.mrb[0].mxu0 %v298
        %v408 = vpop.f32.mrb[0].mxu0
        %v409 = vadd.f32 %v268, %v408
        %v410 = vpop.f32.mrb[0].mxu0
        %v411 = vadd.f32 %v272, %v410
        %412 = vdwg.mxu0
        %413 = vst [vmem:[%s232] sm:$0xff] %v367
        %414 = vst [vmem:[%s232 + $0x8] sm:$0xff] %v369
        %415 = vst [vmem:[%s232 + $0x10] sm:$0xff] %v373
        %416 = vst [vmem:[%s232 + $0x18] sm:$0xff] %v375
        %417 = vst [vmem:[%s232 + $0x20] sm:$0xff] %v379
        %418 = vst [vmem:[%s232 + $0x28] sm:$0xff] %v381
        %419 = vst [vmem:[%s232 + $0x30] sm:$0xff] %v385
        %420 = vst [vmem:[%s232 + $0x38] sm:$0xff] %v387
        %421 = vst [vmem:[%s232 + $0x40] sm:$0xff] %v391
        %422 = vst [vmem:[%s232 + $0x48] sm:$0xff] %v393
        %423 = vst [vmem:[%s232 + $0x50] sm:$0xff] %v397
        %424 = vst [vmem:[%s232 + $0x58] sm:$0xff] %v399
        %425 = vst [vmem:[%s232 + $0x60] sm:$0xff] %v403
        %426 = vst [vmem:[%s232 + $0x68] sm:$0xff] %v405
        %427 = vst [vmem:[%s232 + $0x70] sm:$0xff] %v409
        %428 = vst [vmem:[%s232 + $0x78] sm:$0xff] %v411
        %s429 = sand.u32 %s120, 1
        %s430 = scalar_lea.sflag [#allocation4], %s429
        %s431 = sand.u32 %s120, 1
        %s432 = smul.addr %s431, 128
        %s433 = scalar_lea.vmem [#allocation5], %s432
        // Predicated region
        $region37: #{tpu_custom_call.1} parent=31 // pred_check
          %p434 = pneg %p130
        $region38: #{tpu_custom_call.1} parent=31 // pred_check_branch
          %436 = sbr.rel (%p434) target = $region40
        $region39: #{tpu_custom_call.1} parent=31 // pred_region
          %s437 = smul.u32 8, %s24
          %s438 = smul.u32 2, %s25
          %s440 = ssub.s32 2048, 2048
          %441 = vsyncadd %s430, %s440
          %s442 = smul.addr %s437, 4
          %s443 = sadd.s32 %s438, %s442
          %s444 = smul.addr %s443, 128
          %s445 = scalar_lea.hbm %s3, %s444
          %s446 = sshll.u32 %s433, 4
          %s447 = int_to_ptr.vmem [resolvable:$true] %s446
          %452 = dma.vmem_to_hbm [thread:$0]  %s447, 2048, %s445, %s430, 256, 512, 16
        $region40: #{tpu_custom_call.1} parent=31 // pred_fallthru
          _
      $region32: #{tpu_custom_call.1} parent=5 // pred_fallthru
        _
      %p453 = scmp.le.s32.totalorder 2, %s15
      // Predicated region
      $region41: #{tpu_custom_call.1} parent=5 // pred_check
        %p454 = pneg %p453
      $region42: #{tpu_custom_call.1} parent=5 // pred_check_branch
        %456 = sbr.rel (%p454) target = $region44
      $region43: #{tpu_custom_call.1} parent=5 // pred_region
        %s457 = ssub.s32 %s15, 2
        // Predicated region
        $region45: #{tpu_custom_call.1} parent=43 // pred_check
          %p458 = pneg %p136
        $region46: #{tpu_custom_call.1} parent=43 // pred_check_branch
          %460 = sbr.rel (%p458) target = $region48
        $region47: #{tpu_custom_call.1} parent=43 // pred_region
          %s461 = sand.u32 %s121, 1
          %s462 = scalar_lea.sflag [#allocation4], %s461
          %s463 = sand.u32 %s121, 1
          %s464 = smul.addr %s463, 128
          %s465 = scalar_lea.vmem [#allocation5], %s464
          %466 = dma.done %s462, 2048
        $region48: #{tpu_custom_call.1} parent=43 // pred_fallthru
          _
      $region44: #{tpu_custom_call.1} parent=5 // pred_fallthru
        _
    $region6: #{tpu_custom_call.1} parent=1 // loop_footer
      %s19 = sadd.s32 1, %s15
    $region7: #{tpu_custom_call.1} parent=1 // loop_footer_branch
      %14 = sbr.rel target = $region3
    $region8: #{tpu_custom_call.1} parent=1 // loop_exit
      _
    %467 = vsyncpa [#allocation3], 1
    %s468 = scalar_lea.sflag [#allocation3], 1
    %469 = vsyncpa %s468, 1
    %470 = vsyncpa [#allocation4], 1
    %s471 = scalar_lea.sflag [#allocation4], 1
    %472 = vsyncpa %s471, 1

</llo_original>
